<compile_context>
chip_gen: v5e
topology: v5e:2x2
jax: 0.10.0
libtpu: 0.0.40
codegen_flags: <defaults>
</compile_context>

<pallas_src>
import math

import jax
import jax.numpy as jnp
from jax.experimental import pallas as pl
from jax.experimental.pallas import tpu as pltpu


# ----------------------------- configuration --------------------------------
NUM_CLASSES = 8            # nclasses
C_FEAT      = 128          # proxy backbone feature width (free parameter; 256 would
                           # fill the 256-wide v6e/v7x MXU but doubles proxy FLOPs)
CIN         = 3            # RGB input
CPAD        = 8            # input channels zero-padded to one f32 sublane
K_IM2COL    = 9 * CPAD     # contraction depth of the fused conv matmul (72)


def _choose_tile(HW, W):
    """Output pixels per grid step.

    Whole image when small; otherwise the largest multiple of lcm(128, W)
    (lane-dense maps store + rt-invariant column masks) that divides HW.
    """
    if HW <= 2048:
        return HW
    step = (128 * W) // math.gcd(128, W)
    best = None
    t = step
    while t <= 2048:
        if HW % t == 0:
            best = t
        t += step
    return best if best is not None else HW


# ----------------------------- fused kernel ---------------------------------
def _make_fused_kernel(H, W, TILE):
    HW = H * W
    assert TILE % W == 0 or TILE == HW   # makes the column masks rt-invariant

    def kernel(x_ref, stem_w_ref, stem_b_ref, fc_w_ref, fc_b_ref,
               maps_ref, logits_ref, pool_ref):
        rt = pl.program_id(1)
        n_rt = pl.num_programs(1)

        # Column-boundary masks for the dw = +-1 taps (spatial on the lane axis).
        col = jax.lax.broadcasted_iota(jnp.int32, (1, TILE), 1) % W
        not_left = col > 0           # dw = -1 invalid at w == 0
        not_right = col < (W - 1)    # dw = +1 invalid at w == W-1

        # In-kernel im2col, channel-major: 9 statically shifted (CPAD, TILE) f32
        # reads of the halo'd window, boundary-masked on the small lhs pieces,
        # concatenated along sublanes (8-row aligned for f32 -> cheap) and cast
        # once to bf16 -> one (72, TILE) matmul operand.
        pieces = []
        for dh in (-1, 0, 1):
            for dw in (-1, 0, 1):
                off = (W + 1) + dh * W + dw            # static in-window offset
                piece = x_ref[:, off:off + TILE]       # (CPAD, TILE) f32
                if dw == -1:
                    piece = jnp.where(not_left, piece, 0.0)
                elif dw == 1:
                    piece = jnp.where(not_right, piece, 0.0)
                pieces.append(piece)
        lhs = jnp.concatenate(pieces, axis=0).astype(jnp.bfloat16)   # (72, TILE)

        # ---- stem conv3x3 (pad=1) as ONE K=72 MXU matmul ----
        feat = jnp.dot(stem_w_ref[...], lhs, preferred_element_type=jnp.float32)
        feat = jnp.maximum(feat + stem_b_ref[...], 0.0)   # (C_FEAT, TILE) f32

        # ---- per-pixel classifier (1x1 conv / Linear), still transposed ----
        maps = jnp.dot(fc_w_ref[...], feat.astype(jnp.bfloat16),
                       preferred_element_type=jnp.float32) + fc_b_ref[...]
        # (NUM_CLASSES, TILE) f32, spatial lane-dense.

        # Lane-dense store; map1 comes out NCHW with a plain reshape, no transpose.
        # TODO(synk): could store bf16 here if downstream tolerates it (halves the
        # only O(HW) HBM writeback).
        maps_ref[0] = maps

        # ---- global average pool: accumulate per-class sums across row tiles ----
        @pl.when(rt == 0)
        def _():
            pool_ref[...] = jnp.zeros_like(pool_ref)

        pool_ref[...] += jnp.sum(maps, axis=1, keepdims=True)   # (NUM_CLASSES, 1)

        @pl.when(rt == n_rt - 1)
        def _():
            logits_ref[0] = pool_ref[...] * (1.0 / float(HW))

    return kernel


# ----------------------------- wrapper ---------------------------------------
@jax.jit
def custom_net_forward(x_nchw, params):
    B, Cin, H, W = x_nchw.shape
    HW = H * W
    assert Cin <= CPAD
    TILE = _choose_tile(HW, W)
    assert HW % TILE == 0
    n_rt = HW // TILE
    WIN = TILE + 2 * (W + 1)   # per-tile window incl. the +/-(W+1) zero row-halo

    # NCHW is already channel-major: pad channels to one sublane, flatten spatial
    # onto the lane axis, add a zero halo of (W+1) on each side (covers dh = +-1 at
    # the top/bottom image border), slice one window per row tile (whole image when
    # n_rt == 1).  Pallas DMAs each window once per grid step, auto-pipelined.
    x_cm = jnp.pad(x_nchw.reshape(B, Cin, HW).astype(jnp.float32),
                   ((0, 0), (0, CPAD - Cin), (0, 0)))             # (B, CPAD, HW)
    x_halo = jnp.pad(x_cm, ((0, 0), (0, 0), (W + 1, W + 1)))      # (B, CPAD, HW+2W+2)
    if n_rt == 1:
        x_win = x_halo[:, None]                                   # (B, 1, CPAD, WIN)
    else:
        x_win = jnp.stack(
            [x_halo[:, :, rt * TILE: rt * TILE + WIN] for rt in range(n_rt)], axis=1)

    kernel = _make_fused_kernel(H, W, TILE)
    grid_spec = pltpu.PrefetchScalarGridSpec(
        num_scalar_prefetch=0,
        grid=(B, n_rt),
        in_specs=[
            pl.BlockSpec((None, None, CPAD, WIN), lambda b, rt: (b, rt, 0, 0)),
            pl.BlockSpec((C_FEAT, K_IM2COL), lambda b, rt: (0, 0)),   # stem W^T
            pl.BlockSpec((C_FEAT, 1), lambda b, rt: (0, 0)),          # stem bias
            pl.BlockSpec((NUM_CLASSES, C_FEAT), lambda b, rt: (0, 0)),  # fc W^T
            pl.BlockSpec((NUM_CLASSES, 1), lambda b, rt: (0, 0)),       # fc bias
        ],
        out_specs=[
            pl.BlockSpec((1, NUM_CLASSES, TILE), lambda b, rt: (b, 0, rt)),
            pl.BlockSpec((1, NUM_CLASSES, 1), lambda b, rt: (b, 0, 0)),
        ],
        scratch_shapes=[pltpu.VMEM((NUM_CLASSES, 1), jnp.float32)],   # pooled sums
    )
    maps, logits = pl.pallas_call(
        kernel,
        out_shape=(
            jax.ShapeDtypeStruct((B, NUM_CLASSES, HW), jnp.float32),
            jax.ShapeDtypeStruct((B, NUM_CLASSES, 1), jnp.float32),
        ),
        grid_spec=grid_spec,
        compiler_params=pltpu.CompilerParams(
            # batch axis parallel (fills both v7x TensorCores when B is even);
            # row-tile pooling reduction trailing + arbitrary.
            dimension_semantics=("parallel", "arbitrary"),
            vmem_limit_bytes=32 * 1024 * 1024,   # footprint is <~3 MiB even at TILE=2048
        ),
    )(x_win, params["stem_w_t"], params["stem_b"], params["fc_w_t"], params["fc_b"])

    logits = logits.reshape(B, NUM_CLASSES)     # pre-sigmoid, as the module returns
    probs = jax.nn.sigmoid(logits)              # pre_probs -> sigmoid
    map1 = maps.reshape(B, NUM_CLASSES, H, W)   # already NCHW, plain reshape
    return logits, probs, map1


def init_params(key):
    k_stem, k_fc = jax.random.split(key)
    # Conv2d init: normal(0, sqrt(2 / (kh*kw*out_channels))), bias = 0.
    stem_std = math.sqrt(2.0 / (3 * 3 * C_FEAT))
    stem_w_full = stem_std * jax.random.normal(k_stem, (3, 3, CIN, C_FEAT), jnp.float32)
    w = jnp.pad(stem_w_full, ((0, 0), (0, 0), (0, CPAD - CIN), (0, 0)))  # (3,3,CPAD,Cf)
    stem_w_t = w.reshape(K_IM2COL, C_FEAT).T.astype(jnp.bfloat16)        # (Cf, 72)
    stem_b = jnp.zeros((C_FEAT, 1), jnp.float32)
    # Linear (resnet fc replacement) init: normal(0, 0.01), bias = 0.
    fc_w_full = 0.01 * jax.random.normal(k_fc, (C_FEAT, NUM_CLASSES), jnp.float32)
    fc_w_t = fc_w_full.T.astype(jnp.bfloat16)                            # (8, Cf)
    fc_b = jnp.zeros((NUM_CLASSES, 1), jnp.float32)
    return {
        "stem_w_t": stem_w_t, "stem_b": stem_b, "fc_w_t": fc_w_t, "fc_b": fc_b,
        # unpadded f32 copies, only used by the reference check below
        "stem_w_full": stem_w_full, "fc_w_full": fc_w_full,
    }


if __name__ == "__main__":
    B, H, W = 2, 16, 16
    key = jax.random.PRNGKey(0)
    k_x, k_p = jax.random.split(key)
    x = jax.random.normal(k_x, (B, CIN, H, W), jnp.float32)
    params = init_params(k_p)

    logits, probs, map1 = custom_net_forward(x, params)
    jax.block_until_ready((logits, probs, map1))

    # ---- reference in plain JAX (same bf16-rounded operands, f32 math) ----
    xr = jnp.transpose(x, (0, 2, 3, 1)).astype(jnp.bfloat16).astype(jnp.float32)
    wr = params["stem_w_full"].astype(jnp.bfloat16).astype(jnp.float32)
    feat = jax.lax.conv_general_dilated(
        xr, wr, window_strides=(1, 1), padding="SAME",
        dimension_numbers=("NHWC", "HWIO", "NHWC"))
    feat = jnp.maximum(feat + params["stem_b"].reshape(1, 1, 1, -1), 0.0)
    featq = feat.astype(jnp.bfloat16).astype(jnp.float32).reshape(B, H * W, C_FEAT)
    fcr = params["fc_w_full"].astype(jnp.bfloat16).astype(jnp.float32)
    maps_ref = featq @ fcr                                   # fc bias is zero
    logits_ref = maps_ref.mean(axis=1)
    map1_ref = jnp.transpose(maps_ref.reshape(B, H, W, NUM_CLASSES), (0, 3, 1, 2))

    assert logits.shape == (B, NUM_CLASSES)
    assert probs.shape == (B, NUM_CLASSES)
    assert map1.shape == (B, NUM_CLASSES, H, W)
    assert jnp.allclose(logits, logits_ref, atol=2e-3), "logits mismatch"
    assert jnp.allclose(probs, jax.nn.sigmoid(logits_ref), atol=2e-3), "probs mismatch"
    assert jnp.allclose(map1, map1_ref, atol=2e-3), "map1 mismatch"

    print("KERNEL_OK")
</pallas_src>

<mosaic_0001>
module attributes {stable_mosaic.version = 11 : i64} {
  func.func @kernel(%arg0: i32, %arg1: i32, %arg2: memref<1x1x8x290xf32, #tpu.memory_space<vmem>>, %arg3: memref<128x72xbf16, #tpu.memory_space<vmem>>, %arg4: memref<128x1xf32, #tpu.memory_space<vmem>>, %arg5: memref<8x128xbf16, #tpu.memory_space<vmem>>, %arg6: memref<8x1xf32, #tpu.memory_space<vmem>>, %arg7: memref<1x8x256xf32, #tpu.memory_space<vmem>>, %arg8: memref<1x8x1xf32, #tpu.memory_space<vmem>>, %arg9: memref<8x1xf32, #tpu.memory_space<vmem>>) attributes {dimension_semantics = [#tpu.dimension_semantics<parallel>, #tpu.dimension_semantics<arbitrary>], iteration_bounds = array<i64: 2, 1>, scalar_prefetch = 0 : i64, scratch_operands = 1 : i64, tpu.core_type = #tpu.core_type<tc>, window_params = [{transform_indices = @transform_0, window_bounds = array<i64: 1, 1, 8, 290>}, {pipeline_mode = #tpu.pipeline_mode<synchronous>, transform_indices = @transform_1, window_bounds = array<i64: 128, 72>}, {pipeline_mode = #tpu.pipeline_mode<synchronous>, transform_indices = @transform_2, window_bounds = array<i64: 128, 1>}, {pipeline_mode = #tpu.pipeline_mode<synchronous>, transform_indices = @transform_3, window_bounds = array<i64: 8, 128>}, {pipeline_mode = #tpu.pipeline_mode<synchronous>, transform_indices = @transform_4, window_bounds = array<i64: 8, 1>}, {transform_indices = @transform_5, window_bounds = array<i64: 1, 8, 256>}, {transform_indices = @transform_6, window_bounds = array<i64: 1, 8, 1>}]} {
    %0 = tpu.iota {dimensions = array<i32: 1>} : vector<1x256xi32>
    %c16_i32 = arith.constant 16 : i32
    %c0_i32 = arith.constant 0 : i32
    %1 = arith.cmpi eq, %c16_i32, %c0_i32 : i32
    %c1_i32 = arith.constant 1 : i32
    %2 = arith.select %1, %c1_i32, %c16_i32 : i32
    %3 = vector.broadcast %2 : i32 to vector<1x256xi32>
    %4 = arith.remsi %0, %3 : vector<1x256xi32>
    %c0_i32_0 = arith.constant 0 : i32
    %5 = vector.broadcast %c0_i32_0 : i32 to vector<1x256xi32>
    %6 = arith.cmpi ne, %4, %5 : vector<1x256xi32>
    %c0_i32_1 = arith.constant 0 : i32
    %7 = vector.broadcast %c0_i32_1 : i32 to vector<1x256xi32>
    %8 = arith.cmpi slt, %4, %7 : vector<1x256xi32>
    %c0_i32_2 = arith.constant 0 : i32
    %9 = arith.cmpi slt, %2, %c0_i32_2 : i32
    %10 = vector.broadcast %9 : i1 to vector<1x256xi1>
    %11 = vector.broadcast %10 : vector<1x256xi1> to vector<1x256xi1>
    %12 = arith.xori %8, %11 : vector<1x256xi1>
    %13 = arith.andi %12, %6 : vector<1x256xi1>
    %14 = vector.broadcast %2 : i32 to vector<1x256xi32>
    %15 = arith.addi %4, %14 : vector<1x256xi32>
    %16 = arith.select %13, %15, %4 : vector<1x256xi1>, vector<1x256xi32>
    %c0_i32_3 = arith.constant 0 : i32
    %17 = vector.broadcast %c0_i32_3 : i32 to vector<1x256xi32>
    %18 = arith.cmpi sgt, %16, %17 : vector<1x256xi32>
    %c15_i32 = arith.constant 15 : i32
    %19 = vector.broadcast %c15_i32 : i32 to vector<1x256xi32>
    %20 = arith.cmpi slt, %16, %19 : vector<1x256xi32>
    %c0 = arith.constant 0 : index
    %c0_4 = arith.constant 0 : index
    %c0_5 = arith.constant 0 : index
    %c0_6 = arith.constant 0 : index
    %21 = vector.load %arg2[%c0, %c0_4, %c0_5, %c0_6] : memref<1x1x8x290xf32, #tpu.memory_space<vmem>>, vector<1x1x8x256xf32>
    %22 = vector.shape_cast %21 : vector<1x1x8x256xf32> to vector<8x256xf32>
    %cst = arith.constant 0.000000e+00 : f32
    %23 = vector.shape_cast %18 : vector<1x256xi1> to vector<1x256xi1>
    %24 = vector.broadcast %23 : vector<1x256xi1> to vector<8x256xi1>
    %25 = vector.broadcast %cst : f32 to vector<8x256xf32>
    %26 = arith.select %24, %22, %25 : vector<8x256xi1>, vector<8x256xf32>
    %c0_7 = arith.constant 0 : index
    %c0_8 = arith.constant 0 : index
    %c0_9 = arith.constant 0 : index
    %c1 = arith.constant 1 : index
    %27 = vector.load %arg2[%c0_7, %c0_8, %c0_9, %c1] : memref<1x1x8x290xf32, #tpu.memory_space<vmem>>, vector<1x1x8x256xf32>
    %28 = vector.shape_cast %27 : vector<1x1x8x256xf32> to vector<8x256xf32>
    %c0_10 = arith.constant 0 : index
    %c0_11 = arith.constant 0 : index
    %c0_12 = arith.constant 0 : index
    %c2 = arith.constant 2 : index
    %29 = vector.load %arg2[%c0_10, %c0_11, %c0_12, %c2] : memref<1x1x8x290xf32, #tpu.memory_space<vmem>>, vector<1x1x8x256xf32>
    %30 = vector.shape_cast %29 : vector<1x1x8x256xf32> to vector<8x256xf32>
    %cst_13 = arith.constant 0.000000e+00 : f32
    %31 = vector.shape_cast %20 : vector<1x256xi1> to vector<1x256xi1>
    %32 = vector.broadcast %31 : vector<1x256xi1> to vector<8x256xi1>
    %33 = vector.broadcast %cst_13 : f32 to vector<8x256xf32>
    %34 = arith.select %32, %30, %33 : vector<8x256xi1>, vector<8x256xf32>
    %c0_14 = arith.constant 0 : index
    %c0_15 = arith.constant 0 : index
    %c0_16 = arith.constant 0 : index
    %c16 = arith.constant 16 : index
    %35 = vector.load %arg2[%c0_14, %c0_15, %c0_16, %c16] : memref<1x1x8x290xf32, #tpu.memory_space<vmem>>, vector<1x1x8x256xf32>
    %36 = vector.shape_cast %35 : vector<1x1x8x256xf32> to vector<8x256xf32>
    %cst_17 = arith.constant 0.000000e+00 : f32
    %37 = vector.shape_cast %18 : vector<1x256xi1> to vector<1x256xi1>
    %38 = vector.broadcast %37 : vector<1x256xi1> to vector<8x256xi1>
    %39 = vector.broadcast %cst_17 : f32 to vector<8x256xf32>
    %40 = arith.select %38, %36, %39 : vector<8x256xi1>, vector<8x256xf32>
    %c0_18 = arith.constant 0 : index
    %c0_19 = arith.constant 0 : index
    %c0_20 = arith.constant 0 : index
    %c17 = arith.constant 17 : index
    %41 = vector.load %arg2[%c0_18, %c0_19, %c0_20, %c17] : memref<1x1x8x290xf32, #tpu.memory_space<vmem>>, vector<1x1x8x256xf32>
    %42 = vector.shape_cast %41 : vector<1x1x8x256xf32> to vector<8x256xf32>
    %c0_21 = arith.constant 0 : index
    %c0_22 = arith.constant 0 : index
    %c0_23 = arith.constant 0 : index
    %c18 = arith.constant 18 : index
    %43 = vector.load %arg2[%c0_21, %c0_22, %c0_23, %c18] : memref<1x1x8x290xf32, #tpu.memory_space<vmem>>, vector<1x1x8x256xf32>
    %44 = vector.shape_cast %43 : vector<1x1x8x256xf32> to vector<8x256xf32>
    %cst_24 = arith.constant 0.000000e+00 : f32
    %45 = vector.shape_cast %20 : vector<1x256xi1> to vector<1x256xi1>
    %46 = vector.broadcast %45 : vector<1x256xi1> to vector<8x256xi1>
    %47 = vector.broadcast %cst_24 : f32 to vector<8x256xf32>
    %48 = arith.select %46, %44, %47 : vector<8x256xi1>, vector<8x256xf32>
    %c0_25 = arith.constant 0 : index
    %c0_26 = arith.constant 0 : index
    %c0_27 = arith.constant 0 : index
    %c32 = arith.constant 32 : index
    %49 = vector.load %arg2[%c0_25, %c0_26, %c0_27, %c32] : memref<1x1x8x290xf32, #tpu.memory_space<vmem>>, vector<1x1x8x256xf32>
    %50 = vector.shape_cast %49 : vector<1x1x8x256xf32> to vector<8x256xf32>
    %cst_28 = arith.constant 0.000000e+00 : f32
    %51 = vector.shape_cast %18 : vector<1x256xi1> to vector<1x256xi1>
    %52 = vector.broadcast %51 : vector<1x256xi1> to vector<8x256xi1>
    %53 = vector.broadcast %cst_28 : f32 to vector<8x256xf32>
    %54 = arith.select %52, %50, %53 : vector<8x256xi1>, vector<8x256xf32>
    %c0_29 = arith.constant 0 : index
    %c0_30 = arith.constant 0 : index
    %c0_31 = arith.constant 0 : index
    %c33 = arith.constant 33 : index
    %55 = vector.load %arg2[%c0_29, %c0_30, %c0_31, %c33] : memref<1x1x8x290xf32, #tpu.memory_space<vmem>>, vector<1x1x8x256xf32>
    %56 = vector.shape_cast %55 : vector<1x1x8x256xf32> to vector<8x256xf32>
    %c0_32 = arith.constant 0 : index
    %c0_33 = arith.constant 0 : index
    %c0_34 = arith.constant 0 : index
    %c34 = arith.constant 34 : index
    %57 = vector.load %arg2[%c0_32, %c0_33, %c0_34, %c34] : memref<1x1x8x290xf32, #tpu.memory_space<vmem>>, vector<1x1x8x256xf32>
    %58 = vector.shape_cast %57 : vector<1x1x8x256xf32> to vector<8x256xf32>
    %cst_35 = arith.constant 0.000000e+00 : f32
    %59 = vector.shape_cast %20 : vector<1x256xi1> to vector<1x256xi1>
    %60 = vector.broadcast %59 : vector<1x256xi1> to vector<8x256xi1>
    %61 = vector.broadcast %cst_35 : f32 to vector<8x256xf32>
    %62 = arith.select %60, %58, %61 : vector<8x256xi1>, vector<8x256xf32>
    %63 = tpu.concatenate %26, %28, %34, %40, %42, %48, %54, %56, %62 in 0 : vector<8x256xf32>, vector<8x256xf32>, vector<8x256xf32>, vector<8x256xf32>, vector<8x256xf32>, vector<8x256xf32>, vector<8x256xf32>, vector<8x256xf32>, vector<8x256xf32> -> vector<72x256xf32>
    %64 = arith.truncf %63 : vector<72x256xf32> to vector<72x256xbf16>
    %c0_36 = arith.constant 0 : index
    %c0_37 = arith.constant 0 : index
    %65 = vector.load %arg3[%c0_36, %c0_37] : memref<128x72xbf16, #tpu.memory_space<vmem>>, vector<128x72xbf16>
    %cst_38 = arith.constant dense<0.000000e+00> : vector<128x256xf32>
    %66 = tpu.matmul %65, %64, %cst_38 {dimension_numbers = #tpu.dot_dimension_numbers<[1], [0], [0], [1], [0, 0, 1, 1], [], []>} : vector<128x72xbf16>, vector<72x256xbf16>, vector<128x256xf32> -> vector<128x256xf32>
    %c0_39 = arith.constant 0 : index
    %c0_40 = arith.constant 0 : index
    %67 = vector.load %arg4[%c0_39, %c0_40] : memref<128x1xf32, #tpu.memory_space<vmem>>, vector<128x1xf32>
    %68 = vector.broadcast %67 : vector<128x1xf32> to vector<128x256xf32>
    %69 = arith.addf %66, %68 : vector<128x256xf32>
    %cst_41 = arith.constant 0.000000e+00 : f32
    %70 = vector.broadcast %cst_41 : f32 to vector<128x256xf32>
    %71 = arith.maximumf %69, %70 : vector<128x256xf32>
    %c0_42 = arith.constant 0 : index
    %c0_43 = arith.constant 0 : index
    %72 = vector.load %arg5[%c0_42, %c0_43] : memref<8x128xbf16, #tpu.memory_space<vmem>>, vector<8x128xbf16>
    %73 = arith.truncf %71 : vector<128x256xf32> to vector<128x256xbf16>
    %cst_44 = arith.constant dense<0.000000e+00> : vector<8x256xf32>
    %74 = tpu.matmul %72, %73, %cst_44 {dimension_numbers = #tpu.dot_dimension_numbers<[1], [0], [0], [1], [0, 0, 1, 1], [], []>} : vector<8x128xbf16>, vector<128x256xbf16>, vector<8x256xf32> -> vector<8x256xf32>
    %c0_45 = arith.constant 0 : index
    %c0_46 = arith.constant 0 : index
    %75 = vector.load %arg6[%c0_45, %c0_46] : memref<8x1xf32, #tpu.memory_space<vmem>>, vector<8x1xf32>
    %76 = vector.broadcast %75 : vector<8x1xf32> to vector<8x256xf32>
    %77 = arith.addf %74, %76 : vector<8x256xf32>
    %c0_47 = arith.constant 0 : index
    %c0_48 = arith.constant 0 : index
    %c0_49 = arith.constant 0 : index
    %78 = vector.load %arg7[%c0_47, %c0_48, %c0_49] : memref<1x8x256xf32, #tpu.memory_space<vmem>>, vector<1x8x256xf32>
    %79 = vector.shape_cast %78 : vector<1x8x256xf32> to vector<8x256xf32>
    %80 = vector.shape_cast %77 : vector<8x256xf32> to vector<1x8x256xf32>
    tpu.vector_store %arg7[%c0_47, %c0_48, %c0_49], %80 {strides = array<i32>} : memref<1x8x256xf32, #tpu.memory_space<vmem>>, vector<1x8x256xf32>,
    %c0_i32_50 = arith.constant 0 : i32
    %81 = arith.cmpi eq, %arg1, %c0_i32_50 : i32
    %82 = arith.extui %81 : i1 to i32
    %c0_i32_51 = arith.constant 0 : i32
    %83 = arith.cmpi ne, %82, %c0_i32_51 : i32
    scf.if %83 {
      %cst_59 = arith.constant 0.000000e+00 : f32
      %92 = vector.broadcast %cst_59 : f32 to vector<8x1xf32>
      %c0_60 = arith.constant 0 : index
      %c0_61 = arith.constant 0 : index
      %93 = vector.load %arg9[%c0_60, %c0_61] : memref<8x1xf32, #tpu.memory_space<vmem>>, vector<8x1xf32>
      tpu.vector_store %arg9[%c0_60, %c0_61], %92 {strides = array<i32>} : memref<8x1xf32, #tpu.memory_space<vmem>>, vector<8x1xf32>,
    } else {
    }
    %c0_52 = arith.constant 0 : index
    %c0_53 = arith.constant 0 : index
    %84 = vector.load %arg9[%c0_52, %c0_53] : memref<8x1xf32, #tpu.memory_space<vmem>>, vector<8x1xf32>
    %cst_54 = arith.constant dense<0.000000e+00> : vector<8xf32>
    %85 = vector.multi_reduction <add>, %77, %cst_54 [1] : vector<8x256xf32> to vector<8xf32>
    %86 = vector.shape_cast %85 : vector<8xf32> to vector<8x1xf32>
    %87 = arith.addf %84, %86 : vector<8x1xf32>
    %c0_55 = arith.constant 0 : index
    %c0_56 = arith.constant 0 : index
    %88 = vector.load %arg9[%c0_55, %c0_56] : memref<8x1xf32, #tpu.memory_space<vmem>>, vector<8x1xf32>
    tpu.vector_store %arg9[%c0_55, %c0_56], %87 {strides = array<i32>} : memref<8x1xf32, #tpu.memory_space<vmem>>, vector<8x1xf32>,
    %c0_i32_57 = arith.constant 0 : i32
    %89 = arith.cmpi eq, %arg1, %c0_i32_57 : i32
    %90 = arith.extui %89 : i1 to i32
    %c0_i32_58 = arith.constant 0 : i32
    %91 = arith.cmpi ne, %90, %c0_i32_58 : i32
    scf.if %91 {
      %c0_59 = arith.constant 0 : index
      %c0_60 = arith.constant 0 : index
      %92 = vector.load %arg9[%c0_59, %c0_60] : memref<8x1xf32, #tpu.memory_space<vmem>>, vector<8x1xf32>
      %cst_61 = arith.constant 3.906250e-03 : f32
      %93 = vector.broadcast %cst_61 : f32 to vector<8x1xf32>
      %94 = arith.mulf %92, %93 : vector<8x1xf32>
      %c0_62 = arith.constant 0 : index
      %c0_63 = arith.constant 0 : index
      %c0_64 = arith.constant 0 : index
      %95 = vector.load %arg8[%c0_62, %c0_63, %c0_64] : memref<1x8x1xf32, #tpu.memory_space<vmem>>, vector<1x8x1xf32>
      %96 = vector.shape_cast %95 : vector<1x8x1xf32> to vector<8x1xf32>
      %97 = vector.shape_cast %94 : vector<8x1xf32> to vector<1x8x1xf32>
      tpu.vector_store %arg8[%c0_62, %c0_63, %c0_64], %97 {strides = array<i32>} : memref<1x8x1xf32, #tpu.memory_space<vmem>>, vector<1x8x1xf32>,
    } else {
    }
    return
  }
  func.func @transform_0(%arg0: i32, %arg1: i32) -> (i32, i32, i32, i32) {
    %c0_i32 = arith.constant 0 : i32
    %c0_i32_0 = arith.constant 0 : i32
    %c0_i32_1 = arith.constant 0 : i32
    return %arg0, %arg1, %c0_i32, %c0_i32_0 : i32, i32, i32, i32
  }
  func.func @transform_1(%arg0: i32, %arg1: i32) -> (i32, i32) {
    %c0_i32 = arith.constant 0 : i32
    %c0_i32_0 = arith.constant 0 : i32
    %c0_i32_1 = arith.constant 0 : i32
    return %c0_i32, %c0_i32_0 : i32, i32
  }
  func.func @transform_2(%arg0: i32, %arg1: i32) -> (i32, i32) {
    %c0_i32 = arith.constant 0 : i32
    %c0_i32_0 = arith.constant 0 : i32
    %c0_i32_1 = arith.constant 0 : i32
    return %c0_i32, %c0_i32_0 : i32, i32
  }
  func.func @transform_3(%arg0: i32, %arg1: i32) -> (i32, i32) {
    %c0_i32 = arith.constant 0 : i32
    %c0_i32_0 = arith.constant 0 : i32
    %c0_i32_1 = arith.constant 0 : i32
    return %c0_i32, %c0_i32_0 : i32, i32
  }
  func.func @transform_4(%arg0: i32, %arg1: i32) -> (i32, i32) {
    %c0_i32 = arith.constant 0 : i32
    %c0_i32_0 = arith.constant 0 : i32
    %c0_i32_1 = arith.constant 0 : i32
    return %c0_i32, %c0_i32_0 : i32, i32
  }
  func.func @transform_5(%arg0: i32, %arg1: i32) -> (i32, i32, i32) {
    %c0_i32 = arith.constant 0 : i32
    %c0_i32_0 = arith.constant 0 : i32
    return %arg0, %c0_i32, %arg1 : i32, i32, i32
  }
  func.func @transform_6(%arg0: i32, %arg1: i32) -> (i32, i32, i32) {
    %c0_i32 = arith.constant 0 : i32
    %c0_i32_0 = arith.constant 0 : i32
    %c0_i32_1 = arith.constant 0 : i32
    return %arg0, %c0_i32, %c0_i32_0 : i32, i32, i32
  }
}

</mosaic_0001>

<llo_original>
// kernel: custom_net_forward.1
$region0: #{custom_net_forward.1}
  #allocation0 [shape = 'u32[]', space=smem, size = 0x4, offset = 0x4, fixed_abs, tag = 'smem constant byte address 0x4 - core index']
  #allocation1 [shape = 'u32[72,128]{1,0:T(1,128)}', space=vmem, size = 0x9000, scoped, tag = 'internal scratch']
  #allocation2 [shape = 'f32[8,1]{1,0:T(8,128)}', space=vmem, size = 0x1000, scoped, tag = 'scratch operand']
  %s0 = inlined_call_operand.vmem [shape: f32[2,1,8,290], index: 0, kind: input, shape index: {}]
  %s1 = inlined_call_operand.vmem [shape: bf16[128,72], index: 1, kind: input, shape index: {}]
  %s2 = inlined_call_operand.vmem [shape: f32[128,1], index: 2, kind: input, shape index: {}]
  %s3 = inlined_call_operand.vmem [shape: bf16[8,128], index: 3, kind: input, shape index: {}]
  %s4 = inlined_call_operand.vmem [shape: f32[8,1], index: 4, kind: input, shape index: {}]
  %s5 = inlined_call_operand.vmem [shape: f32[2,8,256], index: 5, kind: output, shape index: {0}]
  %s6 = inlined_call_operand.vmem [shape: f32[2,8,1], index: 6, kind: output, shape index: {1}]
  %7 = xla_tuple %s5, %s6
  %s8 = sld [smem:[#allocation0]]
  $region69: #{custom_net_forward.1} parent=0
    _
  %s10 = ssub.s32 1, %s8
  %s11 = scalar_select 0, %s10, %s8
  loop: start=0, step=1, limit=4
  $region2: #{custom_net_forward.1} parent=0 // loop_pre_header
    _
  $region3: #{custom_net_forward.1} parent=0 // loop_header
    %s13 = sphi 0, %s17
    %p14 = scmp.ge.s32.totalorder %s13, 4
    %s20 = sphi 0, %s32
    %s21 = sphi 0, %s28
    %s22 = sphi 0, %s20
    %s23 = sphi 0, %s21
    %s24 = sphi 0, %s22
    %s25 = sphi 0, %s23
    %s37 = sphi 0, %s39
    %s40 = sphi 0, %s37
    %s41 = sphi 0, %s40
    %s57 = sphi 0, %s41
    %s61 = sphi 0, %s61
    %s63 = sphi 0, %s61
    %s64 = sphi 0, %s63
    %s78 = sphi 0, %s64
    %s82 = sphi 0, %s82
    %s84 = sphi 0, %s82
    %s85 = sphi 0, %s84
    %s99 = sphi 0, %s85
    %s103 = sphi 0, %s103
    %s105 = sphi 0, %s103
    %s106 = sphi 0, %s105
    %s120 = sphi 0, %s106
    %s124 = sphi 0, %s124
    %s126 = sphi 0, %s124
    %s127 = sphi 0, %s126
    %s141 = sphi 0, %s127
    %s149 = sphi 0, %s151
    %s152 = sphi 0, %s149
    %s153 = sphi 0, %s152
    %s169 = sphi 0, %s153
    %s175 = sphi 0, %s177
    %s178 = sphi 0, %s175
    %s179 = sphi 0, %s178
    %s195 = sphi 0, %s179
  $region4: #{custom_net_forward.1} parent=0 // loop_header_branch
    %16 = sbr.rel (%p14) target = $region8
  $region5: #{custom_net_forward.1} parent=0 // loop_body
    %s18 = ssub.s32 %s13, 1
    %s19 = ssub.s32 %s13, 2
    %s26 = sadd.s32 1, %s21
    %p27 = scmp.ge.s32.totalorder %s26, 1
    %s28 = scalar_select %p27, 0, %s26
    %s29 = sadd.s32 1, %s20
    %s30 = scalar_select %p27, %s29, %s20
    %p31 = scmp.ge.s32.totalorder %s30, 2
    %s32 = scalar_select %p31, 0, %s30
    %s33 = ssub.s32 %s20, %s32
    %s34 = ssub.s32 %s21, %s28
    %s35 = sor.u32 %s33, %s34
    %p36 = scmp.eq.s32.totalorder %s35, 0
    %s38 = sadd.s32 %s37, 1
    %s39 = scalar_select %p36, %s37, %s38
    %p42 = pneg %p36
    %p43 = scmp.eq.s32.totalorder %s13, 1
    %p44 = por %p42, %p43
    %p45 = scmp.ne.s32.totalorder %s37, %s40
    %p46 = scmp.eq.s32.totalorder %s13, 0
    %p47 = por %p45, %p46
    %p48 = scmp.ne.s32.totalorder %s37, %s40
    %p49 = scmp.eq.s32.totalorder %s18, 1
    %p50 = por %p48, %p49
    %p51 = scmp.ne.s32.totalorder %s40, %s41
    %p52 = scmp.eq.s32.totalorder %s18, 0
    %p53 = por %p51, %p52
    %p54 = scmp.ne.s32.totalorder %s40, %s41
    %p55 = scmp.eq.s32.totalorder %s19, 1
    %p56 = por %p54, %p55
    %p58 = scmp.ne.s32.totalorder %s41, %s57
    %p59 = scmp.eq.s32.totalorder %s19, 0
    %p60 = por %p58, %p59
    %s62 = sadd.s32 %s61, 1
    %p65 = scmp.eq.s32.totalorder %s13, 1
    %p66 = scmp.ne.s32.totalorder %s61, %s63
    %p67 = scmp.eq.s32.totalorder %s13, 0
    %p68 = por %p66, %p67
    %p69 = scmp.ne.s32.totalorder %s61, %s63
    %p70 = scmp.eq.s32.totalorder %s18, 1
    %p71 = por %p69, %p70
    %p72 = scmp.ne.s32.totalorder %s63, %s64
    %p73 = scmp.eq.s32.totalorder %s18, 0
    %p74 = por %p72, %p73
    %p75 = scmp.ne.s32.totalorder %s63, %s64
    %p76 = scmp.eq.s32.totalorder %s19, 1
    %p77 = por %p75, %p76
    %p79 = scmp.ne.s32.totalorder %s64, %s78
    %p80 = scmp.eq.s32.totalorder %s19, 0
    %p81 = por %p79, %p80
    %s83 = sadd.s32 %s82, 1
    %p86 = scmp.eq.s32.totalorder %s13, 1
    %p87 = scmp.ne.s32.totalorder %s82, %s84
    %p88 = scmp.eq.s32.totalorder %s13, 0
    %p89 = por %p87, %p88
    %p90 = scmp.ne.s32.totalorder %s82, %s84
    %p91 = scmp.eq.s32.totalorder %s18, 1
    %p92 = por %p90, %p91
    %p93 = scmp.ne.s32.totalorder %s84, %s85
    %p94 = scmp.eq.s32.totalorder %s18, 0
    %p95 = por %p93, %p94
    %p96 = scmp.ne.s32.totalorder %s84, %s85
    %p97 = scmp.eq.s32.totalorder %s19, 1
    %p98 = por %p96, %p97
    %p100 = scmp.ne.s32.totalorder %s85, %s99
    %p101 = scmp.eq.s32.totalorder %s19, 0
    %p102 = por %p100, %p101
    %s104 = sadd.s32 %s103, 1
    %p107 = scmp.eq.s32.totalorder %s13, 1
    %p108 = scmp.ne.s32.totalorder %s103, %s105
    %p109 = scmp.eq.s32.totalorder %s13, 0
    %p110 = por %p108, %p109
    %p111 = scmp.ne.s32.totalorder %s103, %s105
    %p112 = scmp.eq.s32.totalorder %s18, 1
    %p113 = por %p111, %p112
    %p114 = scmp.ne.s32.totalorder %s105, %s106
    %p115 = scmp.eq.s32.totalorder %s18, 0
    %p116 = por %p114, %p115
    %p117 = scmp.ne.s32.totalorder %s105, %s106
    %p118 = scmp.eq.s32.totalorder %s19, 1
    %p119 = por %p117, %p118
    %p121 = scmp.ne.s32.totalorder %s106, %s120
    %p122 = scmp.eq.s32.totalorder %s19, 0
    %p123 = por %p121, %p122
    %s125 = sadd.s32 %s124, 1
    %p128 = scmp.eq.s32.totalorder %s13, 1
    %p129 = scmp.ne.s32.totalorder %s124, %s126
    %p130 = scmp.eq.s32.totalorder %s13, 0
    %p131 = por %p129, %p130
    %p132 = scmp.ne.s32.totalorder %s124, %s126
    %p133 = scmp.eq.s32.totalorder %s18, 1
    %p134 = por %p132, %p133
    %p135 = scmp.ne.s32.totalorder %s126, %s127
    %p136 = scmp.eq.s32.totalorder %s18, 0
    %p137 = por %p135, %p136
    %p138 = scmp.ne.s32.totalorder %s126, %s127
    %p139 = scmp.eq.s32.totalorder %s19, 1
    %p140 = por %p138, %p139
    %p142 = scmp.ne.s32.totalorder %s127, %s141
    %p143 = scmp.eq.s32.totalorder %s19, 0
    %p144 = por %p142, %p143
    %s145 = ssub.s32 %s20, %s32
    %s146 = ssub.s32 %s21, %s28
    %s147 = sor.u32 %s145, %s146
    %p148 = scmp.eq.s32.totalorder %s147, 0
    %s150 = sadd.s32 %s149, 1
    %s151 = scalar_select %p148, %s149, %s150
    %p154 = pneg %p148
    %p155 = scmp.eq.s32.totalorder %s13, 1
    %p156 = por %p154, %p155
    %p157 = scmp.ne.s32.totalorder %s149, %s152
    %p158 = scmp.eq.s32.totalorder %s13, 0
    %p159 = por %p157, %p158
    %p160 = scmp.ne.s32.totalorder %s149, %s152
    %p161 = scmp.eq.s32.totalorder %s18, 1
    %p162 = por %p160, %p161
    %p163 = scmp.ne.s32.totalorder %s152, %s153
    %p164 = scmp.eq.s32.totalorder %s18, 0
    %p165 = por %p163, %p164
    %p166 = scmp.ne.s32.totalorder %s152, %s153
    %p167 = scmp.eq.s32.totalorder %s19, 1
    %p168 = por %p166, %p167
    %p170 = scmp.ne.s32.totalorder %s153, %s169
    %p171 = scmp.eq.s32.totalorder %s19, 0
    %p172 = por %p170, %p171
    %s173 = ssub.s32 %s20, %s32
    %p174 = scmp.eq.s32.totalorder %s173, 0
    %s176 = sadd.s32 %s175, 1
    %s177 = scalar_select %p174, %s175, %s176
    %p180 = pneg %p174
    %p181 = scmp.eq.s32.totalorder %s13, 1
    %p182 = por %p180, %p181
    %p183 = scmp.ne.s32.totalorder %s175, %s178
    %p184 = scmp.eq.s32.totalorder %s13, 0
    %p185 = por %p183, %p184
    %p186 = scmp.ne.s32.totalorder %s175, %s178
    %p187 = scmp.eq.s32.totalorder %s18, 1
    %p188 = por %p186, %p187
    %p189 = scmp.ne.s32.totalorder %s178, %s179
    %p190 = scmp.eq.s32.totalorder %s18, 0
    %p191 = por %p189, %p190
    %p192 = scmp.ne.s32.totalorder %s178, %s179
    %p193 = scmp.eq.s32.totalorder %s19, 1
    %p194 = por %p192, %p193
    %p196 = scmp.ne.s32.totalorder %s179, %s195
    %p197 = scmp.eq.s32.totalorder %s19, 0
    %p198 = por %p196, %p197
    %p199 = scmp.le.s32.totalorder 1, %s13
    %p200 = scmp.lt.s32.totalorder %s13, 3
    %p201 = pnand %p199, %p200
    %p202 = pneg %p201
    // Predicated region
    $region9: #{custom_net_forward.1} parent=5 // pred_check
      _
    $region10: #{custom_net_forward.1} parent=5 // pred_check_branch
      %204 = sbr.rel (%p201) target = $region12
    $region11: #{custom_net_forward.1} parent=5 // pred_region
      %s205 = ssub.s32 %s13, 1
      // Predicated region
      $region13: #{custom_net_forward.1} parent=11 // pred_check
        %p206 = pneg %p74
      $region14: #{custom_net_forward.1} parent=11 // pred_check_branch
        %208 = sbr.rel (%p206) target = $region16
      $region15: #{custom_net_forward.1} parent=11 // pred_region
        _
      $region16: #{custom_net_forward.1} parent=11 // pred_fallthru
        _
      // Predicated region
      $region17: #{custom_net_forward.1} parent=11 // pred_check
        %p209 = pneg %p95
      $region18: #{custom_net_forward.1} parent=11 // pred_check_branch
        %211 = sbr.rel (%p209) target = $region20
      $region19: #{custom_net_forward.1} parent=11 // pred_region
        _
      $region20: #{custom_net_forward.1} parent=11 // pred_fallthru
        _
      // Predicated region
      $region21: #{custom_net_forward.1} parent=11 // pred_check
        %p212 = pneg %p116
      $region22: #{custom_net_forward.1} parent=11 // pred_check_branch
        %214 = sbr.rel (%p212) target = $region24
      $region23: #{custom_net_forward.1} parent=11 // pred_region
        _
      $region24: #{custom_net_forward.1} parent=11 // pred_fallthru
        _
      // Predicated region
      $region25: #{custom_net_forward.1} parent=11 // pred_check
        %p215 = pneg %p137
      $region26: #{custom_net_forward.1} parent=11 // pred_check_branch
        %217 = sbr.rel (%p215) target = $region28
      $region27: #{custom_net_forward.1} parent=11 // pred_region
        _
      $region28: #{custom_net_forward.1} parent=11 // pred_fallthru
        _
    $region12: #{custom_net_forward.1} parent=5 // pred_fallthru
      _
    %p218 = scmp.lt.s32.totalorder %s13, 2
    // Predicated region
    $region29: #{custom_net_forward.1} parent=5 // pred_check
      %p219 = pneg %p218
    $region30: #{custom_net_forward.1} parent=5 // pred_check_branch
      %221 = sbr.rel (%p219) target = $region32
    $region31: #{custom_net_forward.1} parent=5 // pred_region
      // Predicated region
      $region33: #{custom_net_forward.1} parent=31 // pred_check
        %p222 = pneg %p47
      $region34: #{custom_net_forward.1} parent=31 // pred_check_branch
        %224 = sbr.rel (%p222) target = $region36
      $region35: #{custom_net_forward.1} parent=31 // pred_region
        %p225 = scmp.lt.s32.totalorder %s20, 1
        %s226 = scalar_select %p225, %s20, 1
        %p227 = scmp.lt.s32.totalorder %s21, 0
        %s228 = scalar_select %p227, %s21, 0
        %s229 = smul.addr %s228, 3
        %s230 = smul.addr %s226, 3
        %s231 = sadd.s32 %s229, %s230
        %s232 = smul.addr %s231, 8
        %s233 = scalar_lea.vmem %s0, %s232
      $region36: #{custom_net_forward.1} parent=31 // pred_fallthru
        _
    $region32: #{custom_net_forward.1} parent=5 // pred_fallthru
      _
    %p234 = scmp.le.s32.totalorder 1, %s13
    %p235 = scmp.lt.s32.totalorder %s13, 3
    %p236 = pnand %p234, %p235
    %p237 = pneg %p236
    // Predicated region
    $region37: #{custom_net_forward.1} parent=5 // pred_check
      _
    $region38: #{custom_net_forward.1} parent=5 // pred_check_branch
      %239 = sbr.rel (%p236) target = $region40
    $region39: #{custom_net_forward.1} parent=5 // pred_region
      %s240 = ssub.s32 %s13, 1
      %p241 = scmp.lt.s32.totalorder %s22, 1
      %s242 = scalar_select %p241, %s22, 1
      %p243 = scmp.lt.s32.totalorder %s23, 0
      %s244 = scalar_select %p243, %s23, 0
      %s245 = smul.addr %s244, 3
      %s246 = smul.addr %s242, 3
      %s247 = sadd.s32 %s245, %s246
      %s248 = smul.addr %s247, 8
      %s249 = scalar_lea.vmem %s0, %s248
      %p250 = pneg %p53
      %p251 = pneg %p50
      %p252 = pneg %p74
      %p253 = pneg %p71
      %p254 = pneg %p95
      %p255 = pneg %p92
      %p256 = pneg %p116
      %p257 = pneg %p113
      %p258 = pneg %p137
      %p259 = pneg %p134
      %p260 = pneg %p165
      %p261 = pneg %p162
      %s262 = smul.u32 2, %s23
      %p263 = scmp.lt.s32.totalorder %s22, 1
      %s264 = scalar_select %p263, %s22, 1
      %p265 = scmp.lt.s32.totalorder %s262, 1
      %s266 = scalar_select %p265, %s262, 1
      %s267 = smul.addr %s264, 2
      %s268 = sadd.s32 %s266, %s267
      %s269 = smul.addr %s268, 8
      %s270 = scalar_lea.vmem %s5, %s269
      %p271 = pneg %p191
      %p272 = pneg %p188
      %p273 = scmp.lt.s32.totalorder %s22, 1
      %s274 = scalar_select %p273, %s22, 1
      %s275 = smul.addr %s274, 8
      %s276 = scalar_lea.vmem %s6, %s275
      %p277 = scmp.lt.s32.totalorder %s22, 1
      %s278 = scalar_select %p277, %s22, 1
      %p279 = scmp.lt.s32.totalorder %s23, 0
      %s280 = scalar_select %p279, %s23, 0
      %s281 = smul.addr %s280, 3
      %s282 = smul.addr %s278, 3
      %s283 = sadd.s32 %s281, %s282
      %s284 = smul.addr %s283, 8
      %s285 = scalar_lea.vmem %s0, %s284
      %s286 = smul.u32 2, %s23
      %p287 = scmp.lt.s32.totalorder %s22, 1
      %s288 = scalar_select %p287, %s22, 1
      %p289 = scmp.lt.s32.totalorder %s286, 1
      %s290 = scalar_select %p289, %s286, 1
      %s291 = smul.addr %s288, 2
      %s292 = sadd.s32 %s290, %s291
      %s293 = smul.addr %s292, 8
      %s294 = scalar_lea.vmem %s5, %s293
      %s295 = smul.u32 2, %s23
      %p296 = scmp.lt.s32.totalorder %s22, 1
      %s297 = scalar_select %p296, %s22, 1
      %s298 = smul.addr %s297, 8
      %s299 = scalar_lea.vmem %s6, %s298
      %v301 = vlaneseq
      %v302 = vand.u32 %v301, 127
      %v303 = vadd.s32 %v302, 128
      %vm304 = vcmp.lt.s32.totalorder %v302, 0
      %v305 = vsub.s32 0, %v302
      %v306 = vsel %vm304, %v305, %v302
      %v307 = vshrl.u32 %v306, 4
      %v308 = vand.u32 %v306, 15
      %v309 = vsub.s32 0, %v308
      %v310 = vsel %vm304, %v309, %v308
      %vm311 = vcmp.lt.s32.totalorder %v303, 0
      %v312 = vsub.s32 0, %v303
      %v313 = vsel %vm311, %v312, %v303
      %v314 = vshrl.u32 %v313, 4
      %v315 = vand.u32 %v313, 15
      %v316 = vsub.s32 0, %v315
      %v317 = vsel %vm311, %v316, %v315
      %vm318 = vcmp.ne.s32.totalorder %v310, 0
      %vm319 = vcmp.ne.s32.totalorder %v317, 0
      %vm320 = vcmp.lt.s32.totalorder %v310, 0
      %vm321 = vcmp.lt.s32.totalorder %v317, 0
      %vm322 = vmand %vm320, %vm318
      %vm323 = vmand %vm321, %vm319
      %v324 = vadd.s32 %v310, 16
      %v325 = vadd.s32 %v317, 16
      %v326 = vsel %vm322, %v324, %v310
      %v327 = vsel %vm323, %v325, %v317
      %vm328 = vcmp.gt.s32.totalorder %v326, 0
      %vm329 = vcmp.gt.s32.totalorder %v327, 0
      %vm330 = vcmp.lt.s32.totalorder %v326, 15
      %vm331 = vcmp.lt.s32.totalorder %v327, 15
      %v332 = vld [vmem:[%s285] sm:$0xff]
      %v333 = vld [vmem:[%s285 + $0x8] sm:$0xff]
      %v334 = vsel %vm328, 1, 0
      %v335 = vsel %vm329, 1, 0
      %vm336 = vcmp.eq.s32.totalorder %v334, 1
      %vm337 = vcmp.eq.s32.totalorder %v335, 1
      %v338 = vsel %vm336, %v332, 0.0
      %v339 = vsel %vm337, %v333, 0.0
      %v340 = vld [vmem:[%s285 + $0x10] sm:$0xff]
      %v341 = vsel %vm330, 1, 0
      %v342 = vsel %vm331, 1, 0
      %vm343 = vcmp.eq.s32.totalorder %v341, 1
      %vm344 = vcmp.eq.s32.totalorder %v342, 1
      %348 = vrot.lane.b32.xlu0 %v332, 126
      %v349 = vpop.permute.xlu0 %348
      %350 = vrot.lane.b32.xlu0 %v333, 126
      %v351 = vpop.permute.xlu0 %350
      %352 = vrot.lane.b32.xlu0 %v340, 126
      %v353 = vpop.permute.xlu0 %352
      %vm354 = vcmask 1031168
      %v355 = vsel %vm354, %v349, %v351
      %v356 = vsel %vm354, %v351, %v353
      %v359 = vsel %vm343, %v355, 0.0
      %v360 = vsel %vm344, %v356, 0.0
      %361 = vrot.lane.b32.xlu0 %v332, 112
      %v362 = vpop.permute.xlu0 %361
      %363 = vrot.lane.b32.xlu0 %v333, 112
      %v364 = vpop.permute.xlu0 %363
      %365 = vrot.lane.b32.xlu0 %v340, 112
      %v366 = vpop.permute.xlu0 %365
      %vm367 = vcmask 916480
      %v368 = vsel %vm367, %v362, %v364
      %v369 = vsel %vm367, %v364, %v366
      %v372 = vsel %vm336, %v368, 0.0
      %v373 = vsel %vm337, %v369, 0.0
      %374 = vrot.lane.b32.xlu0 %v332, 110
      %v375 = vpop.permute.xlu0 %374
      %376 = vrot.lane.b32.xlu0 %v333, 110
      %v377 = vpop.permute.xlu0 %376
      %378 = vrot.lane.b32.xlu0 %v340, 110
      %v379 = vpop.permute.xlu0 %378
      %vm380 = vcmask 900096
      %v381 = vsel %vm380, %v375, %v377
      %v382 = vsel %vm380, %v377, %v379
      %v385 = vsel %vm343, %v381, 0.0
      %v386 = vsel %vm344, %v382, 0.0
      %387 = vrot.lane.b32.xlu0 %v332, 96
      %v388 = vpop.permute.xlu0 %387
      %389 = vrot.lane.b32.xlu0 %v333, 96
      %v390 = vpop.permute.xlu0 %389
      %391 = vrot.lane.b32.xlu0 %v340, 96
      %v392 = vpop.permute.xlu0 %391
      %vm393 = vcmask 785408
      %v394 = vsel %vm393, %v388, %v390
      %v395 = vsel %vm393, %v390, %v392
      %v398 = vsel %vm336, %v394, 0.0
      %v399 = vsel %vm337, %v395, 0.0
      %400 = vrot.lane.b32.xlu0 %v332, 94
      %v401 = vpop.permute.xlu0 %400
      %402 = vrot.lane.b32.xlu0 %v333, 94
      %v403 = vpop.permute.xlu0 %402
      %404 = vrot.lane.b32.xlu0 %v340, 94
      %v405 = vpop.permute.xlu0 %404
      %vm406 = vcmask 769024
      %v407 = vsel %vm406, %v401, %v403
      %v408 = vsel %vm406, %v403, %v405
      %v411 = vsel %vm343, %v407, 0.0
      %v412 = vsel %vm344, %v408, 0.0
      %413 = vrot.lane.b32.xlu0 %v332, 127
      %v414 = vpop.permute.xlu0 %413
      %415 = vrot.lane.b32.xlu0 %v333, 127
      %v416 = vpop.permute.xlu0 %415
      %417 = vrot.lane.b32.xlu0 %v340, 127
      %v418 = vpop.permute.xlu0 %417
      %vm419 = vcmask 1039360
      %v420 = vsel %vm419, %v414, %v416
      %v421 = vsel %vm419, %v416, %v418
      %424 = vrot.lane.b32.xlu0 %v332, 111
      %v425 = vpop.permute.xlu0 %424
      %426 = vrot.lane.b32.xlu0 %v333, 111
      %v427 = vpop.permute.xlu0 %426
      %428 = vrot.lane.b32.xlu0 %v340, 111
      %v429 = vpop.permute.xlu0 %428
      %vm430 = vcmask 908288
      %v431 = vsel %vm430, %v425, %v427
      %v432 = vsel %vm430, %v427, %v429
      %435 = vrot.lane.b32.xlu0 %v332, 95
      %v436 = vpop.permute.xlu0 %435
      %437 = vrot.lane.b32.xlu0 %v333, 95
      %v438 = vpop.permute.xlu0 %437
      %439 = vrot.lane.b32.xlu0 %v340, 95
      %v440 = vpop.permute.xlu0 %439
      %vm441 = vcmask 777216
      %v442 = vsel %vm441, %v436, %v438
      %v443 = vsel %vm441, %v438, %v440
      %v446 = vpack.c.bf16 %v420, %v338
      %v447 = vpack.c.bf16 %v421, %v339
      %v448 = vpack.c.bf16 %v372, %v359
      %v449 = vpack.c.bf16 %v373, %v360
      %v450 = vpack.c.bf16 %v385, %v431
      %v451 = vpack.c.bf16 %v386, %v432
      %v452 = vpack.c.bf16 %v442, %v398
      %v453 = vpack.c.bf16 %v443, %v399
      %v454 = vpack.c.bf16 %v411, %v411
      %v455 = vpack.c.bf16 %v412, %v412
      %v456 = vld [vmem:[%s1] sm:$0xf]
      %v457 = vld [vmem:[%s1 + $0x4] sm:$0xf]
      %v458 = vld [vmem:[%s1 + $0x8] sm:$0xf]
      %v459 = vld [vmem:[%s1 + $0xc] sm:$0xf]
      %v460 = vld [vmem:[%s1 + $0x10] sm:$0xf]
      %v461 = vld [vmem:[%s1 + $0x14] sm:$0xf]
      %v462 = vld [vmem:[%s1 + $0x18] sm:$0xf]
      %v463 = vld [vmem:[%s1 + $0x1c] sm:$0xf]
      %v464 = vld [vmem:[%s1 + $0x20] sm:$0xf]
      %v465 = vld [vmem:[%s1 + $0x24] sm:$0xf]
      %v466 = vld [vmem:[%s1 + $0x28] sm:$0xf]
      %v467 = vld [vmem:[%s1 + $0x2c] sm:$0xf]
      %v468 = vld [vmem:[%s1 + $0x30] sm:$0xf]
      %v469 = vld [vmem:[%s1 + $0x34] sm:$0xf]
      %v470 = vld [vmem:[%s1 + $0x38] sm:$0xf]
      %v471 = vld [vmem:[%s1 + $0x3c] sm:$0xf]
      %v472 = vld [vmem:[%s2] sm:$0xff]
      %v473 = vld [vmem:[%s2 + $0x8] sm:$0xff]
      %v474 = vld [vmem:[%s2 + $0x10] sm:$0xff]
      %v475 = vld [vmem:[%s2 + $0x18] sm:$0xff]
      %v476 = vld [vmem:[%s2 + $0x20] sm:$0xff]
      %v477 = vld [vmem:[%s2 + $0x28] sm:$0xff]
      %v478 = vld [vmem:[%s2 + $0x30] sm:$0xff]
      %v479 = vld [vmem:[%s2 + $0x38] sm:$0xff]
      %v480 = vld [vmem:[%s2 + $0x40] sm:$0xff]
      %v481 = vld [vmem:[%s2 + $0x48] sm:$0xff]
      %v482 = vld [vmem:[%s2 + $0x50] sm:$0xff]
      %v483 = vld [vmem:[%s2 + $0x58] sm:$0xff]
      %v484 = vld [vmem:[%s2 + $0x60] sm:$0xff]
      %v485 = vld [vmem:[%s2 + $0x68] sm:$0xff]
      %v486 = vld [vmem:[%s2 + $0x70] sm:$0xff]
      %v487 = vld [vmem:[%s2 + $0x78] sm:$0xff]
      %489 = vset.pattern.permute.xlu0 0
      %490 = vperm.xlu0 %489, %v472
      %v491 = vpop.permute.xlu0 %490
      %494 = vset.pattern.permute.xlu0 0
      %495 = vperm.xlu0 %494, %v473
      %v496 = vpop.permute.xlu0 %495
      %499 = vset.pattern.permute.xlu0 0
      %500 = vperm.xlu0 %499, %v474
      %v501 = vpop.permute.xlu0 %500
      %504 = vset.pattern.permute.xlu0 0
      %505 = vperm.xlu0 %504, %v475
      %v506 = vpop.permute.xlu0 %505
      %509 = vset.pattern.permute.xlu0 0
      %510 = vperm.xlu0 %509, %v476
      %v511 = vpop.permute.xlu0 %510
      %514 = vset.pattern.permute.xlu0 0
      %515 = vperm.xlu0 %514, %v477
      %v516 = vpop.permute.xlu0 %515
      %519 = vset.pattern.permute.xlu0 0
      %520 = vperm.xlu0 %519, %v478
      %v521 = vpop.permute.xlu0 %520
      %524 = vset.pattern.permute.xlu0 0
      %525 = vperm.xlu0 %524, %v479
      %v526 = vpop.permute.xlu0 %525
      %529 = vset.pattern.permute.xlu0 0
      %530 = vperm.xlu0 %529, %v480
      %v531 = vpop.permute.xlu0 %530
      %534 = vset.pattern.permute.xlu0 0
      %535 = vperm.xlu0 %534, %v481
      %v536 = vpop.permute.xlu0 %535
      %539 = vset.pattern.permute.xlu0 0
      %540 = vperm.xlu0 %539, %v482
      %v541 = vpop.permute.xlu0 %540
      %544 = vset.pattern.permute.xlu0 0
      %545 = vperm.xlu0 %544, %v483
      %v546 = vpop.permute.xlu0 %545
      %549 = vset.pattern.permute.xlu0 0
      %550 = vperm.xlu0 %549, %v484
      %v551 = vpop.permute.xlu0 %550
      %554 = vset.pattern.permute.xlu0 0
      %555 = vperm.xlu0 %554, %v485
      %v556 = vpop.permute.xlu0 %555
      %559 = vset.pattern.permute.xlu0 0
      %560 = vperm.xlu0 %559, %v486
      %v561 = vpop.permute.xlu0 %560
      %564 = vset.pattern.permute.xlu0 0
      %565 = vperm.xlu0 %564, %v487
      %v566 = vpop.permute.xlu0 %565
      %v584 = vunpack.c.l.b16 %v456
      %v585 = vunpack.c.l.b16 %v457
      %v586 = vunpack.c.l.b16 %v458
      %v587 = vunpack.c.l.b16 %v459
      %v588 = vunpack.c.l.b16 %v460
      %v589 = vunpack.c.l.b16 %v461
      %v590 = vunpack.c.l.b16 %v462
      %v591 = vunpack.c.l.b16 %v463
      %v592 = vunpack.c.l.b16 %v464
      %v593 = vunpack.c.l.b16 %v465
      %v594 = vunpack.c.l.b16 %v466
      %v595 = vunpack.c.l.b16 %v467
      %v596 = vunpack.c.l.b16 %v468
      %v597 = vunpack.c.l.b16 %v469
      %v598 = vunpack.c.l.b16 %v470
      %v599 = vunpack.c.l.b16 %v471
      %v600 = vpack.c.b16 %v585, %v584
      %v601 = vpack.c.b16 %v587, %v586
      %v602 = vpack.c.b16 %v589, %v588
      %v603 = vpack.c.b16 %v591, %v590
      %v604 = vpack.c.b16 %v593, %v592
      %v605 = vpack.c.b16 %v595, %v594
      %v606 = vpack.c.b16 %v597, %v596
      %v607 = vpack.c.b16 %v599, %v598
      %vm608 = vcmask 588800
      %v610 = vsel %vm608, %v600, 0
      %v613 = vsel %vm608, %v601, 0
      %v616 = vsel %vm608, %v602, 0
      %v619 = vsel %vm608, %v603, 0
      %v622 = vsel %vm608, %v604, 0
      %v625 = vsel %vm608, %v605, 0
      %v628 = vsel %vm608, %v606, 0
      %v631 = vsel %vm608, %v607, 0
      %vm633 = vcmask 1043456
      %v635 = vsel %vm633, %v454, 0
      %v638 = vsel %vm633, %v455, 0
      %640 = vmatpush.bf16.msra.mxu0 0
      %641 = vmatpush.bf16.msra.mxu0 0
      %642 = vmatpush.bf16.msra.mxu0 0
      %643 = vmatpush.bf16.msra.mxu0 %v635
      %644 = vmatpush.bf16.msra.mxu0 %v452
      %645 = vmatpush.bf16.msra.mxu0 %v450
      %646 = vmatpush.bf16.msra.mxu0 %v448
      %647 = vmatpush.bf16.msra.mxu0 %v446
      %648 = vmatmul.bf16.gmra.mxu0 %v610
      %v649 = vpop.f32.mrf.mxu0
      %v650 = vadd.f32 %v491, %v649
      %v651 = vpop.f32.mrf.mxu0
      %v652 = vadd.f32 %v496, %v651
      %653 = vmatmul.bf16.gmra.mxu0 %v613
      %v654 = vpop.f32.mrf.mxu0
      %v655 = vadd.f32 %v501, %v654
      %v656 = vpop.f32.mrf.mxu0
      %v657 = vadd.f32 %v506, %v656
      %658 = vmatmul.bf16.gmra.mxu0 %v616
      %v659 = vpop.f32.mrf.mxu0
      %v660 = vadd.f32 %v511, %v659
      %v661 = vpop.f32.mrf.mxu0
      %v662 = vadd.f32 %v516, %v661
      %663 = vmatmul.bf16.gmra.mxu0 %v619
      %v664 = vpop.f32.mrf.mxu0
      %v665 = vadd.f32 %v521, %v664
      %v666 = vpop.f32.mrf.mxu0
      %v667 = vadd.f32 %v526, %v666
      %668 = vmatmul.bf16.gmra.mxu0 %v622
      %v669 = vpop.f32.mrf.mxu0
      %v670 = vadd.f32 %v531, %v669
      %v671 = vpop.f32.mrf.mxu0
      %v672 = vadd.f32 %v536, %v671
      %673 = vmatmul.bf16.gmra.mxu0 %v625
      %v674 = vpop.f32.mrf.mxu0
      %v675 = vadd.f32 %v541, %v674
      %v676 = vpop.f32.mrf.mxu0
      %v677 = vadd.f32 %v546, %v676
      %678 = vmatmul.bf16.gmra.mxu0 %v628
      %v679 = vpop.f32.mrf.mxu0
      %v680 = vadd.f32 %v551, %v679
      %v681 = vpop.f32.mrf.mxu0
      %v682 = vadd.f32 %v556, %v681
      %683 = vmatmul.bf16.gmra.mxu0 %v631
      %v684 = vpop.f32.mrf.mxu0
      %v685 = vadd.f32 %v561, %v684
      %v686 = vpop.f32.mrf.mxu0
      %v687 = vadd.f32 %v566, %v686
      %688 = vdwg.mxu0
      %689 = vmatpush.bf16.msra.mxu0 0
      %690 = vmatpush.bf16.msra.mxu0 0
      %691 = vmatpush.bf16.msra.mxu0 0
      %692 = vmatpush.bf16.msra.mxu0 %v638
      %693 = vmatpush.bf16.msra.mxu0 %v453
      %694 = vmatpush.bf16.msra.mxu0 %v451
      %695 = vmatpush.bf16.msra.mxu0 %v449
      %696 = vmatpush.bf16.msra.mxu0 %v447
      %697 = vmatmul.bf16.gmra.mxu0 %v610
      %v698 = vpop.f32.mrf.mxu0
      %v699 = vadd.f32 %v491, %v698
      %v700 = vpop.f32.mrf.mxu0
      %v701 = vadd.f32 %v496, %v700
      %702 = vmatmul.bf16.gmra.mxu0 %v613
      %v703 = vpop.f32.mrf.mxu0
      %v704 = vadd.f32 %v501, %v703
      %v705 = vpop.f32.mrf.mxu0
      %v706 = vadd.f32 %v506, %v705
      %707 = vmatmul.bf16.gmra.mxu0 %v616
      %v708 = vpop.f32.mrf.mxu0
      %v709 = vadd.f32 %v511, %v708
      %v710 = vpop.f32.mrf.mxu0
      %v711 = vadd.f32 %v516, %v710
      %712 = vmatmul.bf16.gmra.mxu0 %v619
      %v713 = vpop.f32.mrf.mxu0
      %v714 = vadd.f32 %v521, %v713
      %v715 = vpop.f32.mrf.mxu0
      %v716 = vadd.f32 %v526, %v715
      %717 = vmatmul.bf16.gmra.mxu0 %v622
      %v718 = vpop.f32.mrf.mxu0
      %v719 = vadd.f32 %v531, %v718
      %v720 = vpop.f32.mrf.mxu0
      %v721 = vadd.f32 %v536, %v720
      %722 = vmatmul.bf16.gmra.mxu0 %v625
      %v723 = vpop.f32.mrf.mxu0
      %v724 = vadd.f32 %v541, %v723
      %v725 = vpop.f32.mrf.mxu0
      %v726 = vadd.f32 %v546, %v725
      %727 = vmatmul.bf16.gmra.mxu0 %v628
      %v728 = vpop.f32.mrf.mxu0
      %v729 = vadd.f32 %v551, %v728
      %v730 = vpop.f32.mrf.mxu0
      %v731 = vadd.f32 %v556, %v730
      %732 = vmatmul.bf16.gmra.mxu0 %v631
      %v733 = vpop.f32.mrf.mxu0
      %v734 = vadd.f32 %v561, %v733
      %v735 = vpop.f32.mrf.mxu0
      %v736 = vadd.f32 %v566, %v735
      %737 = vdwg.mxu0
      %v738 = vmax.f32 %v650, 0.0
      %v739 = vmax.f32 %v699, 0.0
      %v740 = vmax.f32 %v652, 0.0
      %v741 = vmax.f32 %v701, 0.0
      %v742 = vmax.f32 %v655, 0.0
      %v743 = vmax.f32 %v704, 0.0
      %v744 = vmax.f32 %v657, 0.0
      %v745 = vmax.f32 %v706, 0.0
      %v746 = vmax.f32 %v660, 0.0
      %v747 = vmax.f32 %v709, 0.0
      %v748 = vmax.f32 %v662, 0.0
      %v749 = vmax.f32 %v711, 0.0
      %v750 = vmax.f32 %v665, 0.0
      %v751 = vmax.f32 %v714, 0.0
      %v752 = vmax.f32 %v667, 0.0
      %v753 = vmax.f32 %v716, 0.0
      %v754 = vmax.f32 %v670, 0.0
      %v755 = vmax.f32 %v719, 0.0
      %v756 = vmax.f32 %v672, 0.0
      %v757 = vmax.f32 %v721, 0.0
      %v758 = vmax.f32 %v675, 0.0
      %v759 = vmax.f32 %v724, 0.0
      %v760 = vmax.f32 %v677, 0.0
      %v761 = vmax.f32 %v726, 0.0
      %v762 = vmax.f32 %v680, 0.0
      %v763 = vmax.f32 %v729, 0.0
      %v764 = vmax.f32 %v682, 0.0
      %v765 = vmax.f32 %v731, 0.0
      %v766 = vmax.f32 %v685, 0.0
      %v767 = vmax.f32 %v734, 0.0
      %v768 = vmax.f32 %v687, 0.0
      %v769 = vmax.f32 %v736, 0.0
      %v770 = vld [vmem:[%s3] sm:$0xf]
      %v771 = vpack.c.bf16 %v740, %v738
      %v772 = vpack.c.bf16 %v741, %v739
      %v773 = vpack.c.bf16 %v744, %v742
      %v774 = vpack.c.bf16 %v745, %v743
      %v775 = vpack.c.bf16 %v748, %v746
      %v776 = vpack.c.bf16 %v749, %v747
      %v777 = vpack.c.bf16 %v752, %v750
      %v778 = vpack.c.bf16 %v753, %v751
      %v779 = vpack.c.bf16 %v756, %v754
      %v780 = vpack.c.bf16 %v757, %v755
      %v781 = vpack.c.bf16 %v760, %v758
      %v782 = vpack.c.bf16 %v761, %v759
      %v783 = vpack.c.bf16 %v764, %v762
      %v784 = vpack.c.bf16 %v765, %v763
      %v785 = vpack.c.bf16 %v768, %v766
      %v786 = vpack.c.bf16 %v769, %v767
      %v787 = vld [vmem:[%s4] sm:$0xff]
      %789 = vset.pattern.permute.xlu0 0
      %790 = vperm.xlu0 %789, %v787
      %v791 = vpop.permute.xlu0 %790
      %793 = vmatpush.bf16.msra.mxu0 %v785
      %794 = vmatpush.bf16.msra.mxu0 %v783
      %795 = vmatpush.bf16.msra.mxu0 %v781
      %796 = vmatpush.bf16.msra.mxu0 %v779
      %797 = vmatpush.bf16.msra.mxu0 %v777
      %798 = vmatpush.bf16.msra.mxu0 %v775
      %799 = vmatpush.bf16.msra.mxu0 %v773
      %800 = vmatpush.bf16.msra.mxu0 %v771
      %801 = vmatmul.bf16.gmra.mxu0 %v770
      %v802 = vpop.f32.mrf.mxu0
      %v803 = vadd.f32 %v791, %v802
      %v804 = vpop.f32.mrf.mxu0
      %805 = vdwg.mxu0
      %806 = vmatpush.bf16.msra.mxu0 %v786
      %807 = vmatpush.bf16.msra.mxu0 %v784
      %808 = vmatpush.bf16.msra.mxu0 %v782
      %809 = vmatpush.bf16.msra.mxu0 %v780
      %810 = vmatpush.bf16.msra.mxu0 %v778
      %811 = vmatpush.bf16.msra.mxu0 %v776
      %812 = vmatpush.bf16.msra.mxu0 %v774
      %813 = vmatpush.bf16.msra.mxu0 %v772
      %814 = vmatmul.bf16.gmra.mxu0 %v770
      %v815 = vpop.f32.mrf.mxu0
      %v816 = vadd.f32 %v791, %v815
      %v817 = vpop.f32.mrf.mxu0
      %818 = vdwg.mxu0
      %819 = vst [vmem:[%s294] sm:$0xff] %v803
      %820 = vst [vmem:[%s294 + $0x8] sm:$0xff] %v816
      %p821 = scmp.eq.s32.totalorder %s23, 0
      // Predicated region
      $region41: #{custom_net_forward.1} parent=39 // pred_check
        %p822 = pneg %p821
      $region42: #{custom_net_forward.1} parent=39 // pred_check_branch
        %824 = sbr.rel (%p822) target = $region44
      $region43: #{custom_net_forward.1} parent=39 // pred_region
        %vm825 = vcmask 7168
        %826 = vst.msk [vmem:[#allocation2] sm:$0xff] %vm825, 0.0
      $region44: #{custom_net_forward.1} parent=39 // pred_fallthru
        _
      %v827 = vld [vmem:[#allocation2] sm:$0xff]
      %v828 = vadd.f32 %v803, %v816
      %829 = vadd.xlane.f32.xlu0 %v828
      %v830 = vpop.xlane.xlu0 %829
      %v831 = vadd.f32 %v827, %v830
      %vm832 = vcmask 7168
      %833 = vst.msk [vmem:[#allocation2] sm:$0xff] %vm832, %v831
      // Predicated region
      $region45: #{custom_net_forward.1} parent=39 // pred_check
        %p834 = pneg %p821
      $region46: #{custom_net_forward.1} parent=39 // pred_check_branch
        %836 = sbr.rel (%p834) target = $region48
      $region47: #{custom_net_forward.1} parent=39 // pred_region
        %v837 = vld [vmem:[#allocation2] sm:$0xff]
        %v838 = vmul.f32 %v837, 0.00390625
        %839 = vst.msk [vmem:[%s299] sm:$0xff] %vm832, %v838
      $region48: #{custom_net_forward.1} parent=39 // pred_fallthru
        _
      %s840 = smul.u32 2, %s23
      %p841 = scmp.lt.s32.totalorder %s22, 1
      %s842 = scalar_select %p841, %s22, 1
      %p843 = scmp.lt.s32.totalorder %s840, 1
      %s844 = scalar_select %p843, %s840, 1
      %s845 = smul.addr %s842, 2
      %s846 = sadd.s32 %s844, %s845
      %s847 = smul.addr %s846, 8
      %s848 = scalar_lea.vmem %s5, %s847
      %p849 = scmp.lt.s32.totalorder %s22, 1
      %s850 = scalar_select %p849, %s22, 1
      %s851 = smul.addr %s850, 8
      %s852 = scalar_lea.vmem %s6, %s851
      // Predicated region
      $region49: #{custom_net_forward.1} parent=39 // pred_check
        %p853 = pneg %p162
      $region50: #{custom_net_forward.1} parent=39 // pred_check_branch
        %855 = sbr.rel (%p853) target = $region52
      $region51: #{custom_net_forward.1} parent=39 // pred_region
        %s856 = smul.u32 2, %s23
      $region52: #{custom_net_forward.1} parent=39 // pred_fallthru
        _
      // Predicated region
      $region53: #{custom_net_forward.1} parent=39 // pred_check
        %p857 = pneg %p188
      $region54: #{custom_net_forward.1} parent=39 // pred_check_branch
        %859 = sbr.rel (%p857) target = $region56
      $region55: #{custom_net_forward.1} parent=39 // pred_region
        _
      $region56: #{custom_net_forward.1} parent=39 // pred_fallthru
        _
    $region40: #{custom_net_forward.1} parent=5 // pred_fallthru
      _
    %p860 = scmp.le.s32.totalorder 2, %s13
    // Predicated region
    $region57: #{custom_net_forward.1} parent=5 // pred_check
      %p861 = pneg %p860
    $region58: #{custom_net_forward.1} parent=5 // pred_check_branch
      %863 = sbr.rel (%p861) target = $region60
    $region59: #{custom_net_forward.1} parent=5 // pred_region
      %s864 = ssub.s32 %s13, 2
      // Predicated region
      $region61: #{custom_net_forward.1} parent=59 // pred_check
        %p865 = pneg %p168
      $region62: #{custom_net_forward.1} parent=59 // pred_check_branch
        %867 = sbr.rel (%p865) target = $region64
      $region63: #{custom_net_forward.1} parent=59 // pred_region
        %s868 = smul.u32 2, %s25
        %p869 = scmp.lt.s32.totalorder %s24, 1
        %s870 = scalar_select %p869, %s24, 1
        %p871 = scmp.lt.s32.totalorder %s868, 1
        %s872 = scalar_select %p871, %s868, 1
        %s873 = smul.addr %s870, 2
        %s874 = sadd.s32 %s872, %s873
        %s875 = smul.addr %s874, 8
        %s876 = scalar_lea.vmem %s5, %s875
      $region64: #{custom_net_forward.1} parent=59 // pred_fallthru
        _
      // Predicated region
      $region65: #{custom_net_forward.1} parent=59 // pred_check
        %p877 = pneg %p194
      $region66: #{custom_net_forward.1} parent=59 // pred_check_branch
        %879 = sbr.rel (%p877) target = $region68
      $region67: #{custom_net_forward.1} parent=59 // pred_region
        %p880 = scmp.lt.s32.totalorder %s24, 1
        %s881 = scalar_select %p880, %s24, 1
        %s882 = smul.addr %s881, 8
        %s883 = scalar_lea.vmem %s6, %s882
      $region68: #{custom_net_forward.1} parent=59 // pred_fallthru
        _
    $region60: #{custom_net_forward.1} parent=5 // pred_fallthru
      _
  $region6: #{custom_net_forward.1} parent=0 // loop_footer
    %s17 = sadd.s32 1, %s13
  $region7: #{custom_net_forward.1} parent=0 // loop_footer_branch
    %12 = sbr.rel target = $region3
  $region8: #{custom_net_forward.1} parent=0 // loop_exit
    _

</llo_original>
